<compile_context>
chip_gen: v7x
topology: tpu7x:2x2x1
jax: 0.10.0
libtpu: 0.0.40
codegen_flags: <defaults>
</compile_context>

<pallas_src>
import jax
import jax.numpy as jnp
from jax.experimental import pallas as pl
from jax.experimental.pallas import tpu as pltpu

DIM_Y = 1                       # matches `dim_y = 1` in the reference script

LANE = 128                      # lane width
TARGET_BLOCK_BYTES = 2 << 20    # padded input bytes per block (amortize ~0.35us/step)
VMEM_BUDGET_BYTES = 24 << 20    # cap on double-buffered in+out block footprint
VMEM_LIMIT_BYTES = 32 << 20     # scoped VMEM limit handed to Mosaic (<= v7x physical)
SMALL_FASTPATH_ELEMS = 1 << 16  # below this, a plain XLA slice wins outright


def _round_up(n: int, m: int) -> int:
    return ((n + m - 1) // m) * m


def _round_down(n: int, m: int) -> int:
    return (n // m) * m


def _observation_kernel(xt_ref, ot_ref):
    # xt_ref: (in_rows, tile) block in VMEM, batch on the lane axis.
    # ot_ref: (dim_y,  tile) block in VMEM.
    # Static sublane (row) slice -> contiguous, lane-dense copy & unmasked store.
    ot_ref[...] = xt_ref[: ot_ref.shape[0], :]


def _observation_pallas(x: jax.Array, dim_y: int, max_tile=None) -> jax.Array:
    batch, dim_x = x.shape
    itemsize = jnp.dtype(x.dtype).itemsize
    # Sublane packing multiple: f32 -> 8, bf16 -> 16, int8 -> 32.
    sub_mult = 8 * max(1, 4 // itemsize)

    # Only DMA the sublane rows the kernel actually reads (big win for large dim_x).
    trimmed = _round_up(dim_y, sub_mult)
    in_rows = dim_x if trimmed >= dim_x else trimmed

    sub_in = _round_up(in_rows, sub_mult)   # VMEM rows actually occupied (padded)
    sub_out = _round_up(dim_y, sub_mult)

    # Lane tile: >= ~2 MiB padded input per block, capped by the VMEM budget
    # (2x double buffering of both the input and the output block).
    tile = _round_up(max(TARGET_BLOCK_BYTES // (sub_in * itemsize), LANE), LANE)
    vmem_cap = _round_down(VMEM_BUDGET_BYTES // (2 * (sub_in + sub_out) * itemsize), LANE)
    tile = min(tile, max(vmem_cap, LANE))
    if max_tile is not None:
        tile = min(tile, _round_up(int(max_tile), LANE))

    if batch <= tile:
        # One block covers the whole batch.  Split into two blocks (lets
        # dimension_semantics=("parallel",) shard across v7x's 2 TensorCores)
        # only if each half still carries >= 1 MiB of padded input.
        half = _round_up(-(-batch // 2), LANE)
        if half < batch and half * sub_in * itemsize >= (1 << 20):
            tile = half
        else:
            tile = batch        # full-extent lane block (legal: equals array dim)

    grid = (pl.cdiv(batch, tile),)

    # Layout plumbing: put batch on the lane axis.  allow_input_fusion lets XLA
    # fold this relayout into the kernel input instead of a separate HBM pass.
    xt = x.T  # (dim_x, batch)

    yt = pl.pallas_call(
        _observation_kernel,
        out_shape=jax.ShapeDtypeStruct((dim_y, batch), x.dtype),
        grid=grid,
        in_specs=[pl.BlockSpec((in_rows, tile), lambda i: (0, i))],
        out_specs=pl.BlockSpec((dim_y, tile), lambda i: (0, i)),
        compiler_params=pltpu.CompilerParams(
            dimension_semantics=("parallel",),
            vmem_limit_bytes=VMEM_LIMIT_BYTES,
            allow_input_fusion=[True],
        ),
    )(xt)

    # Back to the module's (batch, dim_y) layout (for dim_y == 1 this is a
    # free reshape).
    return yt.T


def observation_model(x: jax.Array, dim_y: int = DIM_Y, *,
                      force_pallas: bool = False, max_tile=None) -> jax.Array:
    """Pallas equivalent of `observation_model(dim_y).forward(x)`.

    x: (batch, dim_x) -> returns (batch, dim_y)
    """
    batch, dim_x = x.shape
    assert 0 < dim_y <= dim_x

    if batch == 0:
        return x[:, :dim_y]
    if not force_pallas and batch * dim_x < SMALL_FASTPATH_ELEMS:
        # Launch-overhead-bound regime: the plain XLA slice is strictly faster
        # than transpose + pallas_call + transpose.
        return x[:, :dim_y]
    return _observation_pallas(x, dim_y, max_tile=max_tile)


if __name__ == "__main__":
    key = jax.random.PRNGKey(0)
    k1, k2, k3 = jax.random.split(key, 3)

    # 1) Reference Lorenz problem size (dim_x=3, dim_y=1): small-problem fast path.
    x_small = jax.random.normal(k1, (8, 3), dtype=jnp.float32)
    y_small = observation_model(x_small, DIM_Y)
    jax.block_until_ready(y_small)
    assert y_small.shape == (8, DIM_Y) and y_small.dtype == x_small.dtype
    assert bool(jnp.array_equal(y_small, x_small[:, :DIM_Y]))

    # 2) Pallas path: multi-block grid with a ragged final block (4157 = 4*1024 + 61).
    x_med = jax.random.normal(k2, (4157, 3), dtype=jnp.float32)
    y_med = observation_model(x_med, DIM_Y, force_pallas=True, max_tile=1024)
    jax.block_until_ready(y_med)
    assert y_med.shape == (4157, DIM_Y) and y_med.dtype == x_med.dtype
    assert bool(jnp.array_equal(y_med, x_med[:, :DIM_Y]))

    # 3) Pallas path: dim_x > 8 (row-trimmed input DMA) and dim_y > 1.
    x_wide = jax.random.normal(k3, (777, 40), dtype=jnp.float32)
    y_wide = observation_model(x_wide, 3, force_pallas=True)
    jax.block_until_ready(y_wide)
    assert y_wide.shape == (777, 3) and y_wide.dtype == x_wide.dtype
    assert bool(jnp.array_equal(y_wide, x_wide[:, :3]))

    print("KERNEL_OK")
</pallas_src>

<mosaic_0001>
module attributes {stable_mosaic.version = 11 : i64} {
  func.func @_observation_kernel(%arg0: i32, %arg1: memref<3x1024xf32, #tpu.memory_space<vmem>>, %arg2: memref<1x1024xf32, #tpu.memory_space<vmem>>) attributes {dimension_semantics = [#tpu.dimension_semantics<parallel>], iteration_bounds = array<i64: 5>, scalar_prefetch = 0 : i64, scratch_operands = 0 : i64, tpu.core_type = #tpu.core_type<tc>, window_params = [{transform_indices = @transform_0, window_bounds = array<i64: 3, 1024>}, {transform_indices = @transform_1, window_bounds = array<i64: 1, 1024>}]} {
    %c0 = arith.constant 0 : index
    %c0_0 = arith.constant 0 : index
    %0 = vector.load %arg1[%c0, %c0_0] : memref<3x1024xf32, #tpu.memory_space<vmem>>, vector<1x1024xf32>
    %c0_1 = arith.constant 0 : index
    %c0_2 = arith.constant 0 : index
    %1 = vector.load %arg2[%c0_1, %c0_2] : memref<1x1024xf32, #tpu.memory_space<vmem>>, vector<1x1024xf32>
    tpu.vector_store %arg2[%c0_1, %c0_2], %0 {strides = array<i32>} : memref<1x1024xf32, #tpu.memory_space<vmem>>, vector<1x1024xf32>,
    return
  }
  func.func @transform_0(%arg0: i32) -> (i32, i32) {
    %c0_i32 = arith.constant 0 : i32
    %c0_i32_0 = arith.constant 0 : i32
    return %c0_i32, %arg0 : i32, i32
  }
  func.func @transform_1(%arg0: i32) -> (i32, i32) {
    %c0_i32 = arith.constant 0 : i32
    %c0_i32_0 = arith.constant 0 : i32
    return %c0_i32, %arg0 : i32, i32
  }
}

</mosaic_0001>

<llo_original>
// kernel: tpu_custom_call.1
$region0: #{tpu_custom_call.1}
  #allocation0 [shape = 'u32[]', space=smem, size = 0x4, offset = 0x4, fixed_abs, tag = 'smem constant byte address 0x4 - core index']
  #allocation1 [shape = 'u32[144,128]{1,0:T(1,128)}', space=vmem, size = 0x12000, scoped, tag = 'internal scratch']
  %s0 = inlined_call_operand.hbm [shape: f32[3,4157], index: 0, kind: input, shape index: {}]
  %s1 = inlined_call_operand.hbm [shape: f32[1,4157], index: 1, kind: output, shape index: {}]
  %s2 = sld [smem:[#allocation0]]
  $region41: #{tpu_custom_call.1} parent=0
    _
  %s4 = ssub.s32 1, %s2
  %s5 = scalar_select 0, %s4, %s2
  $region1: #{tpu_custom_call.1} parent=0
    #allocation2 [shape = 'u8[32768]{0}', space=vmem, size = 0x8000, scoped, tag = 'input window, operand 0']
    #allocation3 [shape = 's32[2]{0}', space=sflag, size = 0x8, scoped, tag = 'scoped memory for tpu_custom_call.1']
    #allocation4 [shape = 's32[2]{0}', space=sflag, size = 0x8, scoped, tag = 'scoped memory for tpu_custom_call.1']
    #allocation5 [shape = 'u8[8192]{0}', space=vmem, size = 0x2000, scoped, tag = 'output window, operand 0']
    %6 = vsyncpa [#allocation3], 0
    %s7 = scalar_lea.sflag [#allocation3], 1
    %8 = vsyncpa %s7, 0
    %9 = vsyncpa [#allocation4], 0
    %s10 = scalar_lea.sflag [#allocation4], 1
    %11 = vsyncpa %s10, 0
    loop: start=0, step=1, limit=7
    $region2: #{tpu_custom_call.1} parent=1 // loop_pre_header
      _
    $region3: #{tpu_custom_call.1} parent=1 // loop_header
      %s13 = sphi 0, %s17
      %p14 = scmp.ge.s32.totalorder %s13, 7
      %s23 = sphi 0, %s25
      %s26 = sphi 0, %s23
      %s27 = sphi 0, %s26
      %s43 = sphi 0, %s27
      %s49 = sphi 0, %s51
      %s52 = sphi 0, %s49
      %s53 = sphi 0, %s52
      %s69 = sphi 0, %s53
    $region4: #{tpu_custom_call.1} parent=1 // loop_header_branch
      %16 = sbr.rel (%p14) target = $region8
    $region5: #{tpu_custom_call.1} parent=1 // loop_body
      %s18 = ssub.s32 %s13, 1
      %s19 = ssub.s32 %s13, 2
      %s20 = sadd.s32 %s13, 1
      %s21 = ssub.s32 %s13, %s20
      %p22 = scmp.eq.s32.totalorder %s21, 0
      %s24 = sadd.s32 %s23, 1
      %s25 = scalar_select %p22, %s23, %s24
      %p28 = pneg %p22
      %p29 = scmp.eq.s32.totalorder %s13, 4
      %p30 = por %p28, %p29
      %p31 = scmp.ne.s32.totalorder %s23, %s26
      %p32 = scmp.eq.s32.totalorder %s13, 0
      %p33 = por %p31, %p32
      %p34 = scmp.ne.s32.totalorder %s23, %s26
      %p35 = scmp.eq.s32.totalorder %s18, 4
      %p36 = por %p34, %p35
      %p37 = scmp.ne.s32.totalorder %s26, %s27
      %p38 = scmp.eq.s32.totalorder %s18, 0
      %p39 = por %p37, %p38
      %p40 = scmp.ne.s32.totalorder %s26, %s27
      %p41 = scmp.eq.s32.totalorder %s19, 4
      %p42 = por %p40, %p41
      %p44 = scmp.ne.s32.totalorder %s27, %s43
      %p45 = scmp.eq.s32.totalorder %s19, 0
      %p46 = por %p44, %p45
      %s47 = ssub.s32 %s13, %s20
      %p48 = scmp.eq.s32.totalorder %s47, 0
      %s50 = sadd.s32 %s49, 1
      %s51 = scalar_select %p48, %s49, %s50
      %p54 = pneg %p48
      %p55 = scmp.eq.s32.totalorder %s13, 4
      %p56 = por %p54, %p55
      %p57 = scmp.ne.s32.totalorder %s49, %s52
      %p58 = scmp.eq.s32.totalorder %s13, 0
      %p59 = por %p57, %p58
      %p60 = scmp.ne.s32.totalorder %s49, %s52
      %p61 = scmp.eq.s32.totalorder %s18, 4
      %p62 = por %p60, %p61
      %p63 = scmp.ne.s32.totalorder %s52, %s53
      %p64 = scmp.eq.s32.totalorder %s18, 0
      %p65 = por %p63, %p64
      %p66 = scmp.ne.s32.totalorder %s52, %s53
      %p67 = scmp.eq.s32.totalorder %s19, 4
      %p68 = por %p66, %p67
      %p70 = scmp.ne.s32.totalorder %s53, %s69
      %p71 = scmp.eq.s32.totalorder %s19, 0
      %p72 = por %p70, %p71
      %p73 = scmp.le.s32.totalorder 1, %s13
      %p74 = scmp.lt.s32.totalorder %s13, 6
      %p75 = pnand %p73, %p74
      %p76 = pneg %p75
      // Predicated region
      $region9: #{tpu_custom_call.1} parent=5 // pred_check
        _
      $region10: #{tpu_custom_call.1} parent=5 // pred_check_branch
        %78 = sbr.rel (%p75) target = $region12
      $region11: #{tpu_custom_call.1} parent=5 // pred_region
        %s79 = ssub.s32 %s13, 1
      $region12: #{tpu_custom_call.1} parent=5 // pred_fallthru
        _
      %p80 = scmp.lt.s32.totalorder %s13, 5
      // Predicated region
      $region13: #{tpu_custom_call.1} parent=5 // pred_check
        %p81 = pneg %p80
      $region14: #{tpu_custom_call.1} parent=5 // pred_check_branch
        %83 = sbr.rel (%p81) target = $region16
      $region15: #{tpu_custom_call.1} parent=5 // pred_region
        // Predicated region
        $region17: #{tpu_custom_call.1} parent=15 // pred_check
          %p84 = pneg %p33
        $region18: #{tpu_custom_call.1} parent=15 // pred_check_branch
          %86 = sbr.rel (%p84) target = $region20
        $region19: #{tpu_custom_call.1} parent=15 // pred_region
          %s87 = sand.u32 %s23, 1
          %s88 = scalar_lea.sflag [#allocation3], %s87
          %s89 = sand.u32 %s23, 1
          %s90 = smul.addr %s89, 32
          %s91 = scalar_lea.vmem [#allocation2], %s90
          %s92 = smul.u32 8, %s13
          %s93 = ssub.s32 33, %s92
          %p94 = scmp.lt.s32.totalorder %s93, 8
          %s95 = scalar_select %p94, %s93, 8
          %s96 = smul.u32 64, %s95
          %s98 = ssub.s32 512, %s96
          %99 = vsyncadd %s88, %s98
          %p100 = scmp.ne.s32.totalorder 0, %s96
          %s101 = smul.addr %s92, 64
          %s102 = scalar_lea.hbm %s0, %s101
          %s103 = smul.u32 %s95, 4
          %s104 = sshll.u32 %s103, 4
          %s105 = sshll.u32 %s91, 4
          %s106 = int_to_ptr.vmem [resolvable:$true] %s105
          %108 = dma.hbm_to_vmem [thread:$0]  (%p100), %s102, %s104, %s106, %s88
        $region20: #{tpu_custom_call.1} parent=15 // pred_fallthru
          _
      $region16: #{tpu_custom_call.1} parent=5 // pred_fallthru
        _
      %p109 = scmp.le.s32.totalorder 1, %s13
      %p110 = scmp.lt.s32.totalorder %s13, 6
      %p111 = pnand %p109, %p110
      %p112 = pneg %p111
      // Predicated region
      $region21: #{tpu_custom_call.1} parent=5 // pred_check
        _
      $region22: #{tpu_custom_call.1} parent=5 // pred_check_branch
        %114 = sbr.rel (%p111) target = $region24
      $region23: #{tpu_custom_call.1} parent=5 // pred_region
        %s115 = ssub.s32 %s13, 1
        %s116 = sand.u32 %s26, 1
        %s117 = scalar_lea.sflag [#allocation3], %s116
        %s118 = sand.u32 %s26, 1
        %s119 = smul.addr %s118, 32
        %s120 = scalar_lea.vmem [#allocation2], %s119
        // Predicated region
        $region25: #{tpu_custom_call.1} parent=23 // pred_check
          %p121 = pneg %p39
        $region26: #{tpu_custom_call.1} parent=23 // pred_check_branch
          %123 = sbr.rel (%p121) target = $region28
        $region27: #{tpu_custom_call.1} parent=23 // pred_region
          %124 = dma.done %s117, 512
        $region28: #{tpu_custom_call.1} parent=23 // pred_fallthru
          _
        %s125 = sand.u32 %s26, 1
        %s126 = scalar_lea.sflag [#allocation3], %s125
        %s127 = sand.u32 %s26, 1
        %s128 = smul.addr %s127, 32
        %s129 = scalar_lea.vmem [#allocation2], %s128
        %p130 = pneg %p39
        %p131 = pneg %p36
        %p132 = pneg %p65
        %p133 = pneg %p62
        %s134 = sand.u32 %s52, 1
        %s135 = scalar_lea.sflag [#allocation4], %s134
        %s136 = sand.u32 %s52, 1
        %s137 = smul.addr %s136, 8
        %s138 = scalar_lea.vmem [#allocation5], %s137
        %s139 = smul.u32 8, %s18
        %s140 = ssub.s32 33, %s139
        %p141 = scmp.lt.s32.totalorder %s140, 8
        %s142 = scalar_select %p141, %s140, 8
        %s143 = smul.u32 64, %s142
        %s144 = smul.u32 8, %s18
        %s145 = ssub.s32 33, %s144
        %p146 = scmp.lt.s32.totalorder %s145, 8
        %s147 = scalar_select %p146, %s145, 8
        %s148 = smul.u32 16, %s147
        %v149 = vld [vmem:[%s120] ss:$4 sm:$0xff]
        %150 = vst [vmem:[%s138] sm:$0xff] %v149
        %s151 = sand.u32 %s52, 1
        %s152 = scalar_lea.sflag [#allocation4], %s151
        %s153 = sand.u32 %s52, 1
        %s154 = smul.addr %s153, 8
        %s155 = scalar_lea.vmem [#allocation5], %s154
        // Predicated region
        $region29: #{tpu_custom_call.1} parent=23 // pred_check
          %p156 = pneg %p62
        $region30: #{tpu_custom_call.1} parent=23 // pred_check_branch
          %158 = sbr.rel (%p156) target = $region32
        $region31: #{tpu_custom_call.1} parent=23 // pred_region
          %s159 = smul.u32 8, %s18
          %s160 = ssub.s32 33, %s159
          %p161 = scmp.lt.s32.totalorder %s160, 8
          %s162 = scalar_select %p161, %s160, 8
          %s163 = smul.u32 16, %s162
          %s165 = ssub.s32 128, %s163
          %166 = vsyncadd %s152, %s165
          %p167 = scmp.ne.s32.totalorder 0, %s163
          %s168 = smul.addr %s159, 16
          %s169 = scalar_lea.hbm %s1, %s168
          %s170 = sshll.u32 %s162, 4
          %s171 = sshll.u32 %s155, 4
          %s172 = int_to_ptr.vmem [resolvable:$true] %s171
          %174 = dma.vmem_to_hbm [thread:$0]  (%p167), %s172, %s170, %s169, %s152
        $region32: #{tpu_custom_call.1} parent=23 // pred_fallthru
          _
      $region24: #{tpu_custom_call.1} parent=5 // pred_fallthru
        _
      %p175 = scmp.le.s32.totalorder 2, %s13
      // Predicated region
      $region33: #{tpu_custom_call.1} parent=5 // pred_check
        %p176 = pneg %p175
      $region34: #{tpu_custom_call.1} parent=5 // pred_check_branch
        %178 = sbr.rel (%p176) target = $region36
      $region35: #{tpu_custom_call.1} parent=5 // pred_region
        %s179 = ssub.s32 %s13, 2
        // Predicated region
        $region37: #{tpu_custom_call.1} parent=35 // pred_check
          %p180 = pneg %p68
        $region38: #{tpu_custom_call.1} parent=35 // pred_check_branch
          %182 = sbr.rel (%p180) target = $region40
        $region39: #{tpu_custom_call.1} parent=35 // pred_region
          %s183 = sand.u32 %s53, 1
          %s184 = scalar_lea.sflag [#allocation4], %s183
          %s185 = sand.u32 %s53, 1
          %s186 = smul.addr %s185, 8
          %s187 = scalar_lea.vmem [#allocation5], %s186
          %188 = dma.done %s184, 128
        $region40: #{tpu_custom_call.1} parent=35 // pred_fallthru
          _
      $region36: #{tpu_custom_call.1} parent=5 // pred_fallthru
        _
    $region6: #{tpu_custom_call.1} parent=1 // loop_footer
      %s17 = sadd.s32 1, %s13
    $region7: #{tpu_custom_call.1} parent=1 // loop_footer_branch
      %12 = sbr.rel target = $region3
    $region8: #{tpu_custom_call.1} parent=1 // loop_exit
      _
    %189 = vsyncpa [#allocation3], 1
    %s190 = scalar_lea.sflag [#allocation3], 1
    %191 = vsyncpa %s190, 1
    %192 = vsyncpa [#allocation4], 1
    %s193 = scalar_lea.sflag [#allocation4], 1
    %194 = vsyncpa %s193, 1

</llo_original>
